<compile_context>
chip_gen: v7x
topology: tpu7x:2x2x1
jax: 0.10.0
libtpu: 0.0.40
codegen_flags: <defaults>
</compile_context>

<pallas_src>
import functools

import jax
import jax.numpy as jnp
from jax.experimental import pallas as pl
from jax.experimental.pallas import tpu as pltpu


def _round_up(x, m):
    return ((x + m - 1) // m) * m


# ---------------------------------------------------------------------------
# Kernels
# ---------------------------------------------------------------------------
def _logreg_kernel(x_ref, w_ref, b_ref, o_ref):
    # x_ref: (block_b, D_in)  w_ref: (D_in, block_n)
    # b_ref: (1, block_n)     o_ref: (block_b, block_n)
    z = jnp.dot(x_ref[...], w_ref[...], preferred_element_type=jnp.float32)
    z = z + b_ref[...]                                     # bias kept in f32
    # sigmoid(z) = rcp(1 + exp(-z)): exp + reciprocal both run on the EUP.
    p = pl.reciprocal(1.0 + jnp.exp(-z), approx=True)
    o_ref[...] = p.astype(o_ref.dtype)


def _logreg_kernel_acc(x_ref, w_ref, b_ref, o_ref, acc_ref):
    # K-tiled variant: f32 accumulator, init at k==0, epilogue at k==last.
    k = pl.program_id(2)

    @pl.when(k == 0)
    def _():
        acc_ref[...] = jnp.zeros_like(acc_ref)

    acc_ref[...] += jnp.dot(x_ref[...], w_ref[...],
                            preferred_element_type=jnp.float32)

    @pl.when(k == pl.num_programs(2) - 1)
    def _():
        z = acc_ref[...] + b_ref[...]
        o_ref[...] = pl.reciprocal(1.0 + jnp.exp(-z), approx=True).astype(o_ref.dtype)


# ---------------------------------------------------------------------------
# Tiling plan (pure Python, static shapes only)
# ---------------------------------------------------------------------------
def _vmem_budget():
    """Generation-aware (budget, vmem_limit_bytes)."""
    cap = 64 * 1024 * 1024
    try:
        info = pltpu.get_tpu_info()
        cap = getattr(info, "vmem_capacity_bytes", cap) or cap
    except Exception:
        pass
    if cap >= 100 * 1024 * 1024:          # v5e / v6e: 128 MiB physical VMEM
        return 80 * 1024 * 1024, 100 * 1024 * 1024
    return 40 * 1024 * 1024, 48 * 1024 * 1024   # v7x: 64 MiB physical VMEM


def _pick_block_k(d_in, bn, w_bytes, budget):
    # Full-D_in weight tile fits comfortably -> no K tiling.
    if 2 * d_in * bn * w_bytes <= budget // 2:
        return d_in
    # Largest 128-multiple divisor of D_in whose double-buffered weight tile
    # stays well under the budget (exact division keeps the reduction clean).
    cap = max(budget // (6 * bn * w_bytes), 128)
    best = None
    k = 128
    while k <= min(d_in, cap):
        if d_in % k == 0:
            best = k
        k += 128
    if best is not None:
        return best
    # TODO(synk): zero-pad D_in to a 128-multiple to enable K tiling for
    # awkward feature dims; until then fall back to a full-K tile.
    return d_in


def _plan(B, d_in, N, x_dtype, w_dtype):
    x_bytes = x_dtype.itemsize
    w_bytes = w_dtype.itemsize
    out_dtype = jnp.bfloat16 if x_dtype == jnp.bfloat16 else jnp.float32
    out_bytes = jnp.dtype(out_dtype).itemsize
    budget, vmem_limit = _vmem_budget()

    # --- block_n: full-dim (masked store) when N is small, else 128-aligned.
    if N % 128 != 0:
        block_n = N                              # tiny D_out: no padding path
    else:
        block_n = min(N, 512)

    # --- block_k (feature-dim tiling for very large D_in).
    block_k = _pick_block_k(d_in, max(min(block_n, 128), 8), w_bytes, budget)
    k_tiled = block_k < d_in

    # Shrink block_n before starving block_b (only on the 128-aligned path).
    if N % 128 == 0:
        while block_n > 128 and 2 * block_k * block_n * w_bytes > budget // 2:
            block_n = max(128, (block_n // 2 // 128) * 128)

    grid_j = -(-N // block_n)

    # --- block_b from the remaining VMEM budget (double-buffered estimate).
    fixed = 2 * (block_k * block_n * w_bytes + block_n * 4)
    per_row = 2 * (block_k * x_bytes + block_n * out_bytes)
    if k_tiled:
        per_row += block_n * 4                   # f32 accumulator scratch
    max_rows = max((budget - fixed) // per_row, 8)
    if max_rows >= 256:
        max_rows = (max_rows // 256) * 256       # MXU-friendly M
    else:
        max_rows = max((max_rows // 8) * 8, 8)
    # Force >=2 batch tiles ONLY when the weight block index is constant
    # (grid_j == 1, no K axis) -> the split is free and feeds both v7x TCs.
    if grid_j == 1 and not k_tiled and B > 256:
        max_rows = min(max_rows, _round_up(-(-B // 2), 256))
    block_b = B if max_rows >= B else max_rows

    # --- grid order: keep the larger operand constant on the inner axis.
    batch_inner = (d_in * N * w_bytes) > (B * d_in * x_bytes)

    return dict(block_b=block_b, block_n=block_n, block_k=block_k,
                batch_inner=batch_inner, out_dtype=out_dtype,
                vmem_limit=vmem_limit)


# ---------------------------------------------------------------------------
# Parameter preparation (call ONCE per parameter set)
# ---------------------------------------------------------------------------
def prepare_logreg_params(w, b):
    """w: [D_out, D_in] (torch layout), b: [D_out].

    Returns (w_t [D_in, N], b2d [1, N], d_out) ready for the kernel, with N
    padded to a 128 multiple only when the pad ratio is <= 2x."""
    d_out, _ = w.shape
    if w.dtype not in (jnp.float32, jnp.bfloat16):
        w = w.astype(jnp.float32)
    b = b.astype(jnp.float32)

    N = _round_up(d_out, 128)
    if N > 2 * d_out:
        N = d_out                # tiny D_out: masked store beats 16-128x pad

    w_t = jnp.transpose(w)                       # [D_in, D_out]
    if N != d_out:
        w_t = jnp.pad(w_t, ((0, 0), (0, N - d_out)))
        b = jnp.pad(b, (0, N - d_out))
    b2d = b.reshape(1, N)
    return w_t, b2d, d_out


# ---------------------------------------------------------------------------
# pallas_call wrapper
# ---------------------------------------------------------------------------
@functools.partial(
    jax.jit,
    static_argnames=("d_out", "block_b", "block_n", "block_k",
                     "batch_inner", "out_dtype", "vmem_limit"))
def _logreg_call(x, w_t, b2d, *, d_out, block_b, block_n, block_k,
                 batch_inner, out_dtype, vmem_limit):
    B, d_in = x.shape
    N = w_t.shape[1]
    grid_i = pl.cdiv(B, block_b)
    grid_j = pl.cdiv(N, block_n)
    grid_k = pl.cdiv(d_in, block_k)

    x_bytes = x.dtype.itemsize
    w_bytes = w_t.dtype.itemsize
    out_bytes = jnp.dtype(out_dtype).itemsize

    if grid_k > 1:
        # 3D grid: K (reduction) innermost, f32 accumulator scratch.
        grid = (grid_i, grid_j, grid_k)
        in_specs = [
            pl.BlockSpec((block_b, block_k), lambda i, j, k: (i, k)),
            pl.BlockSpec((block_k, block_n), lambda i, j, k: (k, j)),
            pl.BlockSpec((1, block_n), lambda i, j, k: (0, j)),
        ]
        out_spec = pl.BlockSpec((block_b, block_n), lambda i, j, k: (i, j))
        scratch = (pltpu.VMEM((block_b, block_n), jnp.float32),)
        kernel = _logreg_kernel_acc
        dims = ("parallel", "parallel", "arbitrary")
        w_mult, x_mult = grid_i, grid_j
    elif batch_inner:
        # Weight is the big operand: keep its block constant on the inner axis.
        grid = (grid_j, grid_i)
        in_specs = [
            pl.BlockSpec((block_b, block_k), lambda j, i: (i, 0)),
            pl.BlockSpec((block_k, block_n), lambda j, i: (0, j)),
            pl.BlockSpec((1, block_n), lambda j, i: (0, j)),
        ]
        out_spec = pl.BlockSpec((block_b, block_n), lambda j, i: (i, j))
        scratch = ()
        kernel = _logreg_kernel
        dims = ("parallel", "parallel")
        w_mult, x_mult = 1, grid_j
    else:
        # x is the big operand: keep its block constant on the inner axis.
        grid = (grid_i, grid_j)
        in_specs = [
            pl.BlockSpec((block_b, block_k), lambda i, j: (i, 0)),
            pl.BlockSpec((block_k, block_n), lambda i, j: (0, j)),
            pl.BlockSpec((1, block_n), lambda i, j: (0, j)),
        ]
        out_spec = pl.BlockSpec((block_b, block_n), lambda i, j: (i, j))
        scratch = ()
        kernel = _logreg_kernel
        dims = ("parallel", "parallel")
        w_mult, x_mult = grid_i, 1

    cost = pl.CostEstimate(
        flops=2 * B * d_in * d_out,
        transcendentals=B * d_out,
        bytes_accessed=(x_mult * B * d_in * x_bytes
                        + w_mult * d_in * N * w_bytes
                        + N * 4
                        + B * N * out_bytes),
    )

    out = pl.pallas_call(
        kernel,
        out_shape=jax.ShapeDtypeStruct((B, N), out_dtype),
        grid_spec=pltpu.PrefetchScalarGridSpec(
            num_scalar_prefetch=0,
            grid=grid,
            in_specs=in_specs,
            out_specs=out_spec,
            scratch_shapes=scratch),
        compiler_params=pltpu.CompilerParams(
            dimension_semantics=dims,
            vmem_limit_bytes=vmem_limit),
        cost_estimate=cost,
    )(x, w_t, b2d)

    return out if N == d_out else out[:, :d_out]


def logistic_regression(x, w_t, b2d, d_out):
    """Forward pass: sigmoid(x @ w_t + b). Params from prepare_logreg_params."""
    # `x = x.float()` semantics; bf16 is fed to the MXU directly (f32 accum).
    if x.dtype not in (jnp.float32, jnp.bfloat16):
        x = x.astype(jnp.float32)
    plan = _plan(x.shape[0], x.shape[1], w_t.shape[1],
                 jnp.dtype(x.dtype), jnp.dtype(w_t.dtype))
    return _logreg_call(x, w_t, b2d, d_out=d_out, **plan)


# ---------------------------------------------------------------------------
if __name__ == "__main__":
    key = jax.random.PRNGKey(0)
    k_x, k_w, k_b = jax.random.split(key, 3)

    batch = 8
    input_dim = 32
    output_dim = 8

    # Deterministic synthetic inputs / parameters (nn.Linear-like init).
    x = jax.random.normal(k_x, (batch, input_dim), dtype=jnp.float32)
    bound = 1.0 / (input_dim ** 0.5)
    w = jax.random.uniform(k_w, (output_dim, input_dim), jnp.float32, -bound, bound)
    b = jax.random.uniform(k_b, (output_dim,), jnp.float32, -bound, bound)

    # Parameter prep happens once, outside the per-call path.
    w_t, b2d, d_out = prepare_logreg_params(w, b)

    out = logistic_regression(x, w_t, b2d, d_out)
    jax.block_until_ready(out)

    # Reference check in plain JAX (tolerance covers the EUP approx reciprocal).
    ref = jax.nn.sigmoid(x @ w.T + b)
    assert out.shape == (batch, output_dim)
    assert jnp.allclose(out, ref, atol=2e-3, rtol=2e-3), float(
        jnp.max(jnp.abs(out - ref)))

    print("KERNEL_OK")
</pallas_src>

<mosaic_0001>
module attributes {stable_mosaic.version = 11 : i64} {
  func.func @_logreg_kernel(%arg0: i32, %arg1: i32, %arg2: memref<8x32xf32, #tpu.memory_space<vmem>>, %arg3: memref<32x8xf32, #tpu.memory_space<vmem>>, %arg4: memref<1x8xf32, #tpu.memory_space<vmem>>, %arg5: memref<8x8xf32, #tpu.memory_space<vmem>>) attributes {dimension_semantics = [#tpu.dimension_semantics<parallel>, #tpu.dimension_semantics<parallel>], iteration_bounds = array<i64: 1, 1>, scalar_prefetch = 0 : i64, scratch_operands = 0 : i64, tpu.core_type = #tpu.core_type<tc>, window_params = [{transform_indices = @transform_0, window_bounds = array<i64: 8, 32>}, {transform_indices = @transform_1, window_bounds = array<i64: 32, 8>}, {transform_indices = @transform_2, window_bounds = array<i64: 1, 8>}, {transform_indices = @transform_3, window_bounds = array<i64: 8, 8>}]} {
    %c0 = arith.constant 0 : index
    %c0_0 = arith.constant 0 : index
    %0 = vector.load %arg2[%c0, %c0_0] : memref<8x32xf32, #tpu.memory_space<vmem>>, vector<8x32xf32>
    %c0_1 = arith.constant 0 : index
    %c0_2 = arith.constant 0 : index
    %1 = vector.load %arg3[%c0_1, %c0_2] : memref<32x8xf32, #tpu.memory_space<vmem>>, vector<32x8xf32>
    %cst = arith.constant dense<0.000000e+00> : vector<8x8xf32>
    %2 = tpu.matmul %0, %1, %cst {dimension_numbers = #tpu.dot_dimension_numbers<[1], [0], [0], [1], [0, 0, 1, 1], [], []>} : vector<8x32xf32>, vector<32x8xf32>, vector<8x8xf32> -> vector<8x8xf32>
    %c0_3 = arith.constant 0 : index
    %c0_4 = arith.constant 0 : index
    %3 = vector.load %arg4[%c0_3, %c0_4] : memref<1x8xf32, #tpu.memory_space<vmem>>, vector<1x8xf32>
    %4 = vector.broadcast %3 : vector<1x8xf32> to vector<8x8xf32>
    %5 = arith.addf %2, %4 : vector<8x8xf32>
    %cst_5 = arith.constant 0.000000e+00 : f32
    %6 = vector.broadcast %cst_5 : f32 to vector<8x8xf32>
    %7 = arith.subf %6, %5 : vector<8x8xf32>
    %8 = math.exp %7 : vector<8x8xf32>
    %cst_6 = arith.constant 1.000000e+00 : f32
    %9 = vector.broadcast %cst_6 : f32 to vector<8x8xf32>
    %10 = arith.addf %9, %8 : vector<8x8xf32>
    %11 = tpu.reciprocal %10 {approx = true} : vector<8x8xf32> -> vector<8x8xf32>
    %c0_7 = arith.constant 0 : index
    %c0_8 = arith.constant 0 : index
    %12 = vector.load %arg5[%c0_7, %c0_8] : memref<8x8xf32, #tpu.memory_space<vmem>>, vector<8x8xf32>
    tpu.vector_store %arg5[%c0_7, %c0_8], %11 {strides = array<i32>} : memref<8x8xf32, #tpu.memory_space<vmem>>, vector<8x8xf32>,
    return
  }
  func.func @transform_0(%arg0: i32, %arg1: i32) -> (i32, i32) {
    %c0_i32 = arith.constant 0 : i32
    %c0_i32_0 = arith.constant 0 : i32
    return %arg0, %c0_i32 : i32, i32
  }
  func.func @transform_1(%arg0: i32, %arg1: i32) -> (i32, i32) {
    %c0_i32 = arith.constant 0 : i32
    %c0_i32_0 = arith.constant 0 : i32
    return %c0_i32, %arg1 : i32, i32
  }
  func.func @transform_2(%arg0: i32, %arg1: i32) -> (i32, i32) {
    %c0_i32 = arith.constant 0 : i32
    %c0_i32_0 = arith.constant 0 : i32
    return %c0_i32, %arg1 : i32, i32
  }
  func.func @transform_3(%arg0: i32, %arg1: i32) -> (i32, i32) {
    %c0_i32 = arith.constant 0 : i32
    return %arg0, %arg1 : i32, i32
  }
}

</mosaic_0001>

<llo_original>
// kernel: _logreg_call.1
$region0: #{_logreg_call.1}
  #allocation0 [shape = 'u32[]', space=smem, size = 0x4, offset = 0x4, fixed_abs, tag = 'smem constant byte address 0x4 - core index']
  #allocation1 [shape = 'u32[144,128]{1,0:T(1,128)}', space=vmem, size = 0x12000, scoped, tag = 'internal scratch']
  %s0 = inlined_call_operand.vmem [shape: f32[8,32], index: 0, kind: input, shape index: {}]
  %s1 = inlined_call_operand.vmem [shape: f32[32,8], index: 1, kind: input, shape index: {}]
  %s2 = inlined_call_operand.vmem [shape: f32[1,8], index: 2, kind: input, shape index: {}]
  %s3 = inlined_call_operand.hbm [shape: f32[8,8], index: 3, kind: output, shape index: {}]
  %s4 = sld [smem:[#allocation0]]
  $region22: #{_logreg_call.1} parent=0
    _
  %s6 = ssub.s32 1, %s4
  %s7 = scalar_select 0, %s6, %s4
  $region1: #{_logreg_call.1} parent=0
    #allocation2 [shape = 'u8[4096]{0}', space=vmem, size = 0x1000, scoped, tag = 'output window, operand 0, single buffered']
    #allocation3 [shape = 's32[1]{0}', space=sflag, size = 0x4, scoped, tag = 'scoped memory for _logreg_call.1']
    %8 = vsyncpa [#allocation3], 0
    // Predicated region
    $region2: #{_logreg_call.1} parent=1 // pred_check
      _
    $region3: #{_logreg_call.1} parent=1 // pred_check_branch
      %10 = sbr.rel (0) target = $region5
    $region4: #{_logreg_call.1} parent=1 // pred_region
      _
    $region5: #{_logreg_call.1} parent=1 // pred_fallthru
      _
    // Predicated region
    $region6: #{_logreg_call.1} parent=1 // pred_check
      _
    $region7: #{_logreg_call.1} parent=1 // pred_check_branch
      %12 = sbr.rel (0) target = $region9
    $region8: #{_logreg_call.1} parent=1 // pred_region
      _
    $region9: #{_logreg_call.1} parent=1 // pred_fallthru
      _
    // Predicated region
    $region10: #{_logreg_call.1} parent=1 // pred_check
      _
    $region11: #{_logreg_call.1} parent=1 // pred_check_branch
      %14 = sbr.rel (0) target = $region13
    $region12: #{_logreg_call.1} parent=1 // pred_region
      _
    $region13: #{_logreg_call.1} parent=1 // pred_fallthru
      _
    %v15 = vld [vmem:[%s0] sm:$0xff]
    %v16 = vld [vmem:[%s1] sm:$0xff]
    %v17 = vld [vmem:[%s1 + $0x8] sm:$0xff]
    %v18 = vld [vmem:[%s1 + $0x10] sm:$0xff]
    %v19 = vld [vmem:[%s1 + $0x18] sm:$0xff]
    %v20 = vld [vmem:[%s2] sm:$0x1]
    %v22 = vlaneseq
    %v23 = vshrl.u32 %v22, 7
    %v24 = vsub.s32 0, %v23
    %v25 = vrot.slane %v20, %v24
    %vm27 = vcmask 261120
    %v29 = vsel %vm27, %v15, 0
    %31 = vmatprep.subr.mxu0 0.0
    %32 = vmatpush1.msra.mxu0 %v16
    %33 = vmatprep.subr.mxu0 0.0
    %34 = vmatpush1.msra.mxu0 %v17
    %35 = vmatprep.subr.mxu0 0.0
    %36 = vmatpush1.msra.mxu0 %v18
    %37 = vmatprep.subr.mxu0 0.0
    %38 = vmatpush1.msra.mxu0 %v19
    %39 = vmatprep.subr.mxu0 0.0
    %40 = vmatpush1.msra.mxu0 0.0
    %41 = vmatprep.subr.mxu0 0.0
    %42 = vmatpush1.msra.mxu0 0.0
    %43 = vmatprep.subr.mxu0 0.0
    %44 = vmatpush1.msra.mxu0 0.0
    %45 = vmatprep.subr.mxu0 0.0
    %46 = vmatpush1.msra.mxu0 0.0
    %47 = vmatprep.subr.mxu0 0.0
    %48 = vmatpush1.msra.mxu0 0.0
    %49 = vmatprep.subr.mxu0 0.0
    %50 = vmatpush1.msra.mxu0 0.0
    %51 = vmatprep.subr.mxu0 0.0
    %52 = vmatpush1.msra.mxu0 0.0
    %53 = vmatprep.subr.mxu0 0.0
    %54 = vmatpush1.msra.mxu0 0.0
    %55 = vmatprep.subr.mxu0 0.0
    %56 = vmatpush1.msra.mxu0 0.0
    %57 = vmatprep.subr.mxu0 0.0
    %58 = vmatpush1.msra.mxu0 0.0
    %59 = vmatprep.subr.mxu0 0.0
    %60 = vmatpush1.msra.mxu0 0.0
    %61 = vmatprep.subr.mxu0 0.0
    %62 = vmatpush1.msra.mxu0 0.0
    %63 = vmatprep.subr.mxu0 0.0
    %64 = vmatpush1.msra.mxu0 0.0
    %65 = vmatprep.subr.mxu0 0.0
    %66 = vmatpush1.msra.mxu0 0.0
    %67 = vmatprep.subr.mxu0 0.0
    %68 = vmatpush1.msra.mxu0 0.0
    %69 = vmatprep.subr.mxu0 0.0
    %70 = vmatpush1.msra.mxu0 0.0
    %71 = vmatprep.subr.mxu0 0.0
    %72 = vmatpush1.msra.mxu0 0.0
    %73 = vmatprep.subr.mxu0 0.0
    %74 = vmatpush1.msra.mxu0 0.0
    %75 = vmatprep.subr.mxu0 0.0
    %76 = vmatpush1.msra.mxu0 0.0
    %77 = vmatprep.subr.mxu0 0.0
    %78 = vmatpush1.msra.mxu0 0.0
    %79 = vmatprep.subr.mxu0 0.0
    %80 = vmatpush1.msra.mxu0 0.0
    %81 = vmatprep.subr.mxu0 0.0
    %82 = vmatpush1.msra.mxu0 0.0
    %83 = vmatprep.subr.mxu0 0.0
    %84 = vmatpush1.msra.mxu0 0.0
    %85 = vmatprep.subr.mxu0 0.0
    %86 = vmatpush1.msra.mxu0 0.0
    %87 = vmatprep.subr.mxu0 0.0
    %88 = vmatpush1.msra.mxu0 0.0
    %89 = vmatprep.subr.mxu0 0.0
    %90 = vmatpush1.msra.mxu0 0.0
    %91 = vmatprep.subr.mxu0 0.0
    %92 = vmatpush1.msra.mxu0 0.0
    %93 = vmatprep.subr.mxu0 0.0
    %94 = vmatpush1.msra.mxu0 0.0
    %95 = vmatprep.mubr.f32.mxu0 0.0
    %96 = vmatmul.mubr.f32.gmra.mrb[0].mxu0 %v29
    %v97 = vpop.f32.mrb[0].mxu0
    %v98 = vadd.f32 %v25, %v97
    %v99 = vpop.f32.mrb[0].mxu0
    %100 = vdwg.mxu0
    %v101 = vsub.f32 0.0, %v98
    %v102 = vmul.f32 %v101, 1.442695
    %v103 = vpow.pop %v102
    %v104 = vadd.f32 %v103, 1.0
    %v105 = vrcp.pop %v104
    %vm106 = vcmask 64512
    %107 = vst.msk [vmem:[#allocation2] sm:$0xff] %vm106, %v105
    // Predicated region
    $region14: #{_logreg_call.1} parent=1 // pred_check
      _
    $region15: #{_logreg_call.1} parent=1 // pred_check_branch
      %109 = sbr.rel (0) target = $region17
    $region16: #{_logreg_call.1} parent=1 // pred_region
      %s111 = ssub.s32 128, 128
      %112 = vsyncadd [#allocation3], %s111
      %s114 = sshll.u32 [#allocation2], 4
      %s115 = int_to_ptr.vmem [resolvable:$true] %s114
      %117 = dma.vmem_to_hbm [thread:$0]  %s115, 128, %s3, [#allocation3]
    $region17: #{_logreg_call.1} parent=1 // pred_fallthru
      _
    // Predicated region
    $region18: #{_logreg_call.1} parent=1 // pred_check
      _
    $region19: #{_logreg_call.1} parent=1 // pred_check_branch
      %119 = sbr.rel (0) target = $region21
    $region20: #{_logreg_call.1} parent=1 // pred_region
      %120 = dma.done [#allocation3], 128
    $region21: #{_logreg_call.1} parent=1 // pred_fallthru
      _
    %121 = vsyncpa [#allocation3], 1

</llo_original>
